<compile_context>
chip_gen: v6e
topology: v6e:2x2x1
jax: 0.10.0
libtpu: 0.0.40
codegen_flags: <defaults>
</compile_context>

<pallas_src>
import jax
import jax.numpy as jnp
from jax.experimental import pallas as pl
from jax.experimental.pallas import tpu as pltpu


def _gamma_kernel(gamma_ref, img_ref, out_ref):
    # gamma_ref: SMEM scalar (shape (1,), f32)
    # img_ref / out_ref: lane-dense VMEM tiles of shape (BLOCK_ROWS, LANE)
    g = gamma_ref[0]
    x = img_ref[...].astype(jnp.float32)
    # x ** g for x >= 0, g > 0:  exp(g * log(x)).  log(0) = -inf -> exp = 0,
    # so no explicit zero guard is needed (gamma_range keeps g > 0).
    y = jnp.exp(g * jnp.log(x))
    # gain = 1.0, then clamp to [0, 1] like torchvision's adjust_gamma.
    out_ref[...] = jnp.clip(y, 0.0, 1.0).astype(out_ref.dtype)


def adjust_gamma_pallas(image: jax.Array, gamma: jax.Array, *,
                        lane: int = 1024, target_block_rows: int = 512) -> jax.Array:
    """Elementwise gamma adjustment: clamp(image ** gamma, 0, 1)."""
    assert jnp.issubdtype(image.dtype, jnp.floating), (
        "adjust_gamma_pallas expects a floating-point image with values in [0, 1]")
    orig_shape = image.shape
    n = image.size
    gamma_arr = jnp.reshape(gamma.astype(jnp.float32), (1,))

    # --- reshape to a lane-dense slab, pad so the block divides evenly ------
    flat = image.reshape(-1)
    rows = pl.cdiv(n, lane)
    # Block rows: multiple of 8 (sublane), capped at target_block_rows
    # (512 x 1024 x 4 B = 2 MiB -> ~8 MiB with in+out double-buffered), and
    # small enough to yield >= 2 grid steps when the image is big enough,
    # so the parallel grid axis can be sharded across v7x's two TensorCores.
    block_rows = min(target_block_rows, max(8, pl.cdiv(rows, 2)))
    block_rows = pl.cdiv(block_rows, 8) * 8
    rows_padded = pl.cdiv(rows, block_rows) * block_rows
    padded_n = rows_padded * lane
    if padded_n != n:
        # Zero padding is harmless: 0 ** gamma == 0 and is clipped to 0.
        flat = jnp.pad(flat, (0, padded_n - n))
    slab = flat.reshape(rows_padded, lane)
    grid = (rows_padded // block_rows,)

    itemsize = jnp.dtype(image.dtype).itemsize
    out_slab = pl.pallas_call(
        _gamma_kernel,
        out_shape=jax.ShapeDtypeStruct(slab.shape, image.dtype),
        grid=grid,
        in_specs=[
            pl.BlockSpec(memory_space=pltpu.SMEM),                # gamma scalar
            pl.BlockSpec((block_rows, lane), lambda i: (i, 0)),   # image tile
        ],
        out_specs=pl.BlockSpec((block_rows, lane), lambda i: (i, 0)),
        compiler_params=pltpu.CompilerParams(
            dimension_semantics=("parallel",),
        ),
        cost_estimate=pl.CostEstimate(
            flops=3 * padded_n,                     # mul + clamp (min/max)
            transcendentals=2 * padded_n,           # log + exp per element
            bytes_accessed=2 * padded_n * itemsize, # read + write
        ),
    )(gamma_arr, slab)

    # Undo padding / flattening.
    return out_slab.reshape(-1)[:n].reshape(orig_shape)


class RandomGamma:
    """JAX/Pallas equivalent of the PyTorch RandomGamma module."""

    def __init__(self, gamma_range=(0.5, 1.5)):
        if not isinstance(gamma_range, (tuple, list)):
            if isinstance(gamma_range, (int, float)):
                gamma_range = (1 - gamma_range, 1 + gamma_range)
        # exp(g*log(x)) semantics require g > 0 (matches the default range).
        assert gamma_range[0] > 0, "gamma_range must be strictly positive"
        self.gamma_range = gamma_range

    def __call__(self, image: jax.Array, key: jax.Array) -> jax.Array:
        lo, hi = self.gamma_range
        # gamma = rand(1) * (hi - lo) + lo  (deterministic given `key`)
        gamma = jax.random.uniform(key, (1,), dtype=jnp.float32) * (hi - lo) + lo
        return adjust_gamma_pallas(image, gamma)


if __name__ == "__main__":
    key = jax.random.PRNGKey(0)
    k_img, k_gamma = jax.random.split(key)

    # Gray image in PyTorch convention: (1, H, W), values in [0, 1].
    image = jax.random.uniform(k_img, (1, 16, 128), dtype=jnp.float32)

    transform = RandomGamma(gamma_range=(0.5, 1.5))
    out = transform(image, k_gamma)
    out = jax.block_until_ready(out)

    # Reference check in plain JAX.
    gamma_ref = jax.random.uniform(k_gamma, (1,), dtype=jnp.float32) * 1.0 + 0.5
    expected = jnp.clip(image ** gamma_ref[0], 0.0, 1.0)
    assert out.shape == image.shape and out.dtype == image.dtype
    assert jnp.allclose(out, expected, atol=1e-5), "mismatch vs reference"

    print("KERNEL_OK")
</pallas_src>

<mosaic_0001>
module attributes {stable_mosaic.version = 11 : i64} {
  func.func @_gamma_kernel(%arg0: i32, %arg1: memref<1xf32, #tpu.memory_space<smem>>, %arg2: memref<8x1024xf32, #tpu.memory_space<vmem>>, %arg3: memref<8x1024xf32, #tpu.memory_space<vmem>>) attributes {dimension_semantics = [#tpu.dimension_semantics<parallel>], iteration_bounds = array<i64: 1>, scalar_prefetch = 0 : i64, scratch_operands = 0 : i64, tpu.core_type = #tpu.core_type<tc>, window_params = [{transform_indices = @transform_0, window_bounds = array<i64: 1>}, {transform_indices = @transform_1, window_bounds = array<i64: 8, 1024>}, {transform_indices = @transform_2, window_bounds = array<i64: 8, 1024>}]} {
    %c0 = arith.constant 0 : index
    %0 = memref.load %arg1[%c0] : memref<1xf32, #tpu.memory_space<smem>>
    %c0_0 = arith.constant 0 : index
    %c0_1 = arith.constant 0 : index
    %1 = vector.load %arg2[%c0_0, %c0_1] : memref<8x1024xf32, #tpu.memory_space<vmem>>, vector<8x1024xf32>
    %2 = math.log %1 : vector<8x1024xf32>
    %3 = vector.broadcast %0 : f32 to vector<8x1024xf32>
    %4 = arith.mulf %3, %2 : vector<8x1024xf32>
    %5 = math.exp %4 : vector<8x1024xf32>
    %cst = arith.constant 0.000000e+00 : f32
    %cst_2 = arith.constant 1.000000e+00 : f32
    %6 = vector.broadcast %cst : f32 to vector<8x1024xf32>
    %7 = arith.maximumf %6, %5 : vector<8x1024xf32>
    %8 = vector.broadcast %cst_2 : f32 to vector<8x1024xf32>
    %9 = arith.minimumf %8, %7 : vector<8x1024xf32>
    %c0_3 = arith.constant 0 : index
    %c0_4 = arith.constant 0 : index
    %10 = vector.load %arg3[%c0_3, %c0_4] : memref<8x1024xf32, #tpu.memory_space<vmem>>, vector<8x1024xf32>
    tpu.vector_store %arg3[%c0_3, %c0_4], %9 {strides = array<i32>} : memref<8x1024xf32, #tpu.memory_space<vmem>>, vector<8x1024xf32>,
    return
  }
  func.func @transform_0(%arg0: i32) -> i32 {
    %c0_i32 = arith.constant 0 : i32
    %c0_i32_0 = arith.constant 0 : i32
    return %c0_i32 : i32
  }
  func.func @transform_1(%arg0: i32) -> (i32, i32) {
    %c0_i32 = arith.constant 0 : i32
    %c0_i32_0 = arith.constant 0 : i32
    return %arg0, %c0_i32 : i32, i32
  }
  func.func @transform_2(%arg0: i32) -> (i32, i32) {
    %c0_i32 = arith.constant 0 : i32
    %c0_i32_0 = arith.constant 0 : i32
    return %arg0, %c0_i32 : i32, i32
  }
}

</mosaic_0001>

<llo_original>
// kernel: tpu_custom_call.1
$region0: #{tpu_custom_call.1}
  #allocation0 [shape = 'u32[]', space=smem, size = 0x4, offset = 0x4, fixed_abs, tag = 'smem constant byte address 0x4 - core index']
  #allocation1 [shape = 'u32[144,128]{1,0:T(1,128)}', space=vmem, size = 0x12000, scoped, tag = 'internal scratch']
  #allocation2 [shape = 'f32[1]{0:T(128)S(6)}', space=smem, size = 0x200, scoped, tag = 'scoped memory for tpu_custom_call.1']
  %s0 = inlined_call_operand.<no memory space> [shape: f32[1], index: 0, kind: input, shape index: {}]
  %s1 = inlined_call_operand.hbm [shape: f32[8,1024], index: 1, kind: input, shape index: {}]
  %s2 = inlined_call_operand.hbm [shape: f32[8,1024], index: 2, kind: output, shape index: {}]
  %s3 = sld [smem:[#allocation0]]
  $region22: #{tpu_custom_call.1} parent=0
    _
  %s5 = ssub.s32 1, %s3
  %s6 = scalar_select 0, %s5, %s3
  %7 = sst [smem:[#allocation2]] %s0
  $region1: #{tpu_custom_call.1} parent=0
    #allocation3 [shape = 'u8[32768]{0}', space=vmem, size = 0x8000, scoped, tag = 'input window, operand 1, single buffered']
    #allocation4 [shape = 's32[1]{0}', space=sflag, size = 0x4, scoped, tag = 'scoped memory for tpu_custom_call.1']
    #allocation5 [shape = 's32[1]{0}', space=sflag, size = 0x4, scoped, tag = 'scoped memory for tpu_custom_call.1']
    #allocation6 [shape = 'u8[32768]{0}', space=vmem, size = 0x8000, scoped, tag = 'output window, operand 0, single buffered']
    %8 = vsyncpa [#allocation4], 0
    %9 = vsyncpa [#allocation5], 0
    // Predicated region
    $region2: #{tpu_custom_call.1} parent=1 // pred_check
      _
    $region3: #{tpu_custom_call.1} parent=1 // pred_check_branch
      %11 = sbr.rel (0) target = $region5
    $region4: #{tpu_custom_call.1} parent=1 // pred_region
      _
    $region5: #{tpu_custom_call.1} parent=1 // pred_fallthru
      _
    // Predicated region
    $region6: #{tpu_custom_call.1} parent=1 // pred_check
      _
    $region7: #{tpu_custom_call.1} parent=1 // pred_check_branch
      %13 = sbr.rel (0) target = $region9
    $region8: #{tpu_custom_call.1} parent=1 // pred_region
      %s15 = ssub.s32 1024, 1024
      %16 = vsyncadd [#allocation4], %s15
      %s18 = sshll.u32 [#allocation3], 4
      %s19 = int_to_ptr.vmem [resolvable:$true] %s18
      %21 = dma.hbm_to_vmem [thread:$0]  %s1, 1024, %s19, [#allocation4]
    $region9: #{tpu_custom_call.1} parent=1 // pred_fallthru
      _
    // Predicated region
    $region10: #{tpu_custom_call.1} parent=1 // pred_check
      _
    $region11: #{tpu_custom_call.1} parent=1 // pred_check_branch
      %23 = sbr.rel (0) target = $region13
    $region12: #{tpu_custom_call.1} parent=1 // pred_region
      %24 = dma.done [#allocation4], 1024
    $region13: #{tpu_custom_call.1} parent=1 // pred_fallthru
      _
    %s25 = sld [smem:[#allocation2]]
    %v26 = vld [vmem:[#allocation3] sm:$0xff]
    %v27 = vld [vmem:[#allocation3 + $0x8] sm:$0xff]
    %v28 = vld [vmem:[#allocation3 + $0x10] sm:$0xff]
    %v29 = vld [vmem:[#allocation3 + $0x18] sm:$0xff]
    %v30 = vld [vmem:[#allocation3 + $0x20] sm:$0xff]
    %v31 = vld [vmem:[#allocation3 + $0x28] sm:$0xff]
    %v32 = vld [vmem:[#allocation3 + $0x30] sm:$0xff]
    %v33 = vld [vmem:[#allocation3 + $0x38] sm:$0xff]
    %v34 = vlog2.pop %v26
    %v35 = vmul.f32 %v34, 0.6931472
    %v36 = vlog2.pop %v27
    %v37 = vmul.f32 %v36, 0.6931472
    %v38 = vlog2.pop %v28
    %v39 = vmul.f32 %v38, 0.6931472
    %v40 = vlog2.pop %v29
    %v41 = vmul.f32 %v40, 0.6931472
    %v42 = vlog2.pop %v30
    %v43 = vmul.f32 %v42, 0.6931472
    %v44 = vlog2.pop %v31
    %v45 = vmul.f32 %v44, 0.6931472
    %v46 = vlog2.pop %v32
    %v47 = vmul.f32 %v46, 0.6931472
    %v48 = vlog2.pop %v33
    %v49 = vmul.f32 %v48, 0.6931472
    %v50 = vstv %s25
    %v51 = vmul.f32 %v50, %v35
    %v52 = vmul.f32 %v50, %v37
    %v53 = vmul.f32 %v50, %v39
    %v54 = vmul.f32 %v50, %v41
    %v55 = vmul.f32 %v50, %v43
    %v56 = vmul.f32 %v50, %v45
    %v57 = vmul.f32 %v50, %v47
    %v58 = vmul.f32 %v50, %v49
    %v59 = vmul.f32 %v51, 1.442695
    %v60 = vpow.pop %v59
    %v61 = vmul.f32 %v52, 1.442695
    %v62 = vpow.pop %v61
    %v63 = vmul.f32 %v53, 1.442695
    %v64 = vpow.pop %v63
    %v65 = vmul.f32 %v54, 1.442695
    %v66 = vpow.pop %v65
    %v67 = vmul.f32 %v55, 1.442695
    %v68 = vpow.pop %v67
    %v69 = vmul.f32 %v56, 1.442695
    %v70 = vpow.pop %v69
    %v71 = vmul.f32 %v57, 1.442695
    %v72 = vpow.pop %v71
    %v73 = vmul.f32 %v58, 1.442695
    %v74 = vpow.pop %v73
    %v75 = vmax.f32 %v60, 0.0
    %v76 = vmax.f32 %v62, 0.0
    %v77 = vmax.f32 %v64, 0.0
    %v78 = vmax.f32 %v66, 0.0
    %v79 = vmax.f32 %v68, 0.0
    %v80 = vmax.f32 %v70, 0.0
    %v81 = vmax.f32 %v72, 0.0
    %v82 = vmax.f32 %v74, 0.0
    %v83 = vmin.f32 %v75, 1.0
    %v84 = vmin.f32 %v76, 1.0
    %v85 = vmin.f32 %v77, 1.0
    %v86 = vmin.f32 %v78, 1.0
    %v87 = vmin.f32 %v79, 1.0
    %v88 = vmin.f32 %v80, 1.0
    %v89 = vmin.f32 %v81, 1.0
    %v90 = vmin.f32 %v82, 1.0
    %91 = vst [vmem:[#allocation6] sm:$0xff] %v83
    %92 = vst [vmem:[#allocation6 + $0x8] sm:$0xff] %v84
    %93 = vst [vmem:[#allocation6 + $0x10] sm:$0xff] %v85
    %94 = vst [vmem:[#allocation6 + $0x18] sm:$0xff] %v86
    %95 = vst [vmem:[#allocation6 + $0x20] sm:$0xff] %v87
    %96 = vst [vmem:[#allocation6 + $0x28] sm:$0xff] %v88
    %97 = vst [vmem:[#allocation6 + $0x30] sm:$0xff] %v89
    %98 = vst [vmem:[#allocation6 + $0x38] sm:$0xff] %v90
    // Predicated region
    $region14: #{tpu_custom_call.1} parent=1 // pred_check
      _
    $region15: #{tpu_custom_call.1} parent=1 // pred_check_branch
      %100 = sbr.rel (0) target = $region17
    $region16: #{tpu_custom_call.1} parent=1 // pred_region
      %s102 = ssub.s32 1024, 1024
      %103 = vsyncadd [#allocation5], %s102
      %s105 = sshll.u32 [#allocation6], 4
      %s106 = int_to_ptr.vmem [resolvable:$true] %s105
      %108 = dma.vmem_to_hbm [thread:$0]  %s106, 1024, %s2, [#allocation5]
    $region17: #{tpu_custom_call.1} parent=1 // pred_fallthru
      _
    // Predicated region
    $region18: #{tpu_custom_call.1} parent=1 // pred_check
      _
    $region19: #{tpu_custom_call.1} parent=1 // pred_check_branch
      %110 = sbr.rel (0) target = $region21
    $region20: #{tpu_custom_call.1} parent=1 // pred_region
      %111 = dma.done [#allocation5], 1024
    $region21: #{tpu_custom_call.1} parent=1 // pred_fallthru
      _
    %112 = vsyncpa [#allocation4], 1
    %113 = vsyncpa [#allocation5], 1

</llo_original>
